<compile_context>
chip_gen: v7x
topology: tpu7x:2x2x1
jax: 0.10.0
libtpu: 0.0.40
codegen_flags: <defaults>
</compile_context>

<pallas_src>
import functools

import jax
import jax.numpy as jnp
from jax.experimental import pallas as pl
from jax.experimental.pallas import tpu as pltpu


def _round_up(x, m):
    return ((x + m - 1) // m) * m


def dkt_chunk_kernel(x_ref, wih_ref, whh_ref, b_ref, wfc_ref, bfc_ref,
                     yt_ref, h_sc, c_sc, xw_sc, hall_sc,
                     *, chunk_t, unroll):
    """One (batch-tile, time-chunk) cell of the DKT forward.

    Grid = (num_batch_tiles ["parallel"], num_chunks ["arbitrary"/serial]).

    x_ref   : [chunk_t, Bt, Ein]   LSTM input, time-major (Ein = 2E padded)
    wih_ref : [Ein, 4H]            input->gates weight (gate order i,f,o,g)
    whh_ref : [H, 4H]              hidden->gates weight (gate order i,f,o,g)
    b_ref   : [1, 4H]              b_ih + b_hh folded (gate order i,f,o,g)
    wfc_ref : [H, Sp]              fc weight (Sp = num_skills padded to 128k)
    bfc_ref : [1, Sp]              fc bias
    yt_ref  : [chunk_t, Bt, Sp]    sigmoid(fc(h_t)) output block
    h_sc/c_sc : [Bt, H] f32        LSTM state, carried across time-chunks
    xw_sc   : [chunk_t, Bt, 4H] f32  hoisted input projection of the chunk
    hall_sc : [chunk_t, Bt, H] f32   hidden states of the chunk (batched FC)
    """
    H = whh_ref.shape[0]
    Bt = h_sc.shape[0]
    Ein = x_ref.shape[-1]
    Sp = yt_ref.shape[-1]

    # State persists across the sequential time-chunk axis; init at chunk 0
    # (re-initialized for every batch tile since the chunk axis is innermost).
    @pl.when(pl.program_id(1) == 0)
    def _init():
        h_sc[...] = jnp.zeros_like(h_sc)
        c_sc[...] = jnp.zeros_like(c_sc)

    # (1) Hoisted input projection: one [chunk_t*Bt, Ein] x [Ein, 4H] matmul
    #     (plus folded bias) for the whole chunk, parked behind a Ref.
    x2d = x_ref[...].reshape(chunk_t * Bt, Ein)
    xw = jnp.dot(x2d, wih_ref[...], preferred_element_type=jnp.float32)
    xw_sc[...] = (xw + b_ref[...]).reshape(chunk_t, Bt, 4 * H)

    whh = whh_ref[...]          # hoisted recurrent-weight load
    h0 = h_sc[...]
    c0 = c_sc[...]

    # (2) Serial recurrence. Gate order is (i, f, o, g) -> one sigmoid over
    #     the first 3H columns, one tanh over the last H columns per step.
    def step(t, carry):
        h, c = carry
        gates = xw_sc[t] + jnp.dot(h.astype(whh.dtype), whh,
                                   preferred_element_type=jnp.float32)
        sig = jax.nn.sigmoid(gates[:, :3 * H])           # i | f | o
        g_g = jnp.tanh(gates[:, 3 * H:])                  # g
        i_g = sig[:, 0:H]
        f_g = sig[:, H:2 * H]
        o_g = sig[:, 2 * H:3 * H]
        c = f_g * c + i_g * g_g
        h = o_g * jnp.tanh(c)
        hall_sc[t] = h
        return h, c

    h, c = jax.lax.fori_loop(0, chunk_t, step, (h0, c0), unroll=unroll)
    h_sc[...] = h
    c_sc[...] = c

    # (3) Batched FC + sigmoid off the serial chain: one lane-dense matmul
    #     and one unmasked store per chunk.
    hall = hall_sc[...].reshape(chunk_t * Bt, H)
    logits = jnp.dot(hall.astype(wfc_ref.dtype), wfc_ref[...],
                     preferred_element_type=jnp.float32) + bfc_ref[...]
    yt_ref[...] = jax.nn.sigmoid(logits).reshape(chunk_t, Bt, Sp).astype(
        yt_ref.dtype)


def dkt_forward(params, dynamic_skill_embeds, questions, correct_seq,
                *, time_chunk=None, batch_tile=None, use_bf16=False):
    """Mirrors DKT.forward: returns (pred, mask, yt, yt_all)."""
    B, T = questions.shape
    E = dynamic_skill_embeds.shape[1]
    H = params["w_hh"].shape[0]
    S = params["w_fc"].shape[1]

    # mask = (questions[:, 1:] >= 2).float()
    mask = (questions[:, 1:] >= 2).astype(jnp.float32)

    # Embedding lookups directly in TIME-MAJOR layout (transpose fused into
    # the gather; no extra HBM round trip of the activation tensor).
    skill_tm = dynamic_skill_embeds[questions.T]                   # [T, B, E]
    correct_tm = params["correct_embed"][correct_seq.T]            # [T, B, E]
    x_tm = jnp.concatenate([skill_tm, correct_tm], axis=-1)        # [T, B, 2E]
    x_tm = x_tm.astype(jnp.float32)

    # ---- TPU-friendly padded shapes (lane = 128, sublane = 8). ----
    Ein = _round_up(2 * E, 128)            # K of the hoisted projection
    Sp = _round_up(S, 128)                 # lane-dense yt stores / MXU N
    B_pad = _round_up(B, 8)                # aligned sublanes
    if batch_tile is None:
        # Two batch tiles -> the leading "parallel" grid axis can be sharded
        # across the two TensorCores on v7x; single tile otherwise.
        batch_tile = B_pad // 2 if B_pad % 16 == 0 else B_pad
    else:
        batch_tile = _round_up(batch_tile, 8)
        B_pad = _round_up(B_pad, batch_tile)
    num_btiles = B_pad // batch_tile

    x_tm = jnp.pad(x_tm, ((0, 0), (0, B_pad - B), (0, Ein - 2 * E)))

    # Gate-column reorder (i, f, g, o) -> (i, f, o, g), done once on weights.
    def _reorder_gates(w):
        w4 = w.reshape(w.shape[0], 4, H)
        return jnp.concatenate([w4[:, 0], w4[:, 1], w4[:, 3], w4[:, 2]],
                               axis=-1)

    mm_dtype = jnp.bfloat16 if use_bf16 else jnp.float32
    w_ih = jnp.pad(_reorder_gates(params["w_ih"]),
                   ((0, Ein - 2 * E), (0, 0))).astype(mm_dtype)    # [Ein, 4H]
    w_hh = _reorder_gates(params["w_hh"]).astype(mm_dtype)         # [H, 4H]
    b = _reorder_gates(params["b"]).astype(jnp.float32)            # [1, 4H]
    w_fc = jnp.pad(params["w_fc"], ((0, 0), (0, Sp - S))).astype(mm_dtype)
    b_fc = jnp.pad(params["b_fc"], ((0, 0), (0, Sp - S))).astype(jnp.float32)
    x_in = x_tm.astype(mm_dtype)

    # ---- VMEM-aware time-chunk selection (v7x has 64 MiB vs 128 MiB). ----
    try:
        vmem_cap = int(pltpu.get_tpu_info().vmem_capacity_bytes)
    except Exception:
        vmem_cap = 64 * 1024 * 1024
    in_bytes = 2 if use_bf16 else 4
    weights_bytes = 2 * ((Ein * 4 * H + H * 4 * H + H * Sp) * in_bytes
                         + (4 * H + Sp) * 4)              # double-buffered
    per_step_bytes = batch_tile * (2 * Ein * in_bytes     # x block (x2 bufs)
                                   + 2 * Sp * 4           # yt block (x2 bufs)
                                   + 4 * H * 4            # xw scratch
                                   + H * 4)               # hall scratch
    budget = int(vmem_cap * 0.3)
    if time_chunk is None:
        time_chunk = max(8, min(256, (budget - weights_bytes)
                                // max(per_step_bytes, 1)))
        time_chunk = min(time_chunk, _round_up(T, 8))
    time_chunk = max(1, int(time_chunk))
    num_chunks = pl.cdiv(T, time_chunk)
    T_pad = num_chunks * time_chunk
    if T_pad != T:
        # Trailing zero steps: LSTM is causal, outputs for t < T unchanged.
        x_in = jnp.pad(x_in, ((0, T_pad - T), (0, 0), (0, 0)))

    vmem_need = weights_bytes + time_chunk * per_step_bytes
    vmem_limit = int(min(int(0.9 * vmem_cap),
                         max(32 * 1024 * 1024, 2 * vmem_need)))

    unroll = int(max(1, min(8, time_chunk)))
    kernel = functools.partial(dkt_chunk_kernel, chunk_t=time_chunk,
                               unroll=unroll)

    yt_pad = pl.pallas_call(
        kernel,
        out_shape=jax.ShapeDtypeStruct((T_pad, B_pad, Sp), jnp.float32),
        grid=(num_btiles, num_chunks),
        in_specs=[
            pl.BlockSpec((time_chunk, batch_tile, Ein),
                         lambda bt, tc: (tc, bt, 0)),       # x (streamed)
            pl.BlockSpec((Ein, 4 * H), lambda bt, tc: (0, 0)),   # w_ih
            pl.BlockSpec((H, 4 * H), lambda bt, tc: (0, 0)),     # w_hh
            pl.BlockSpec((1, 4 * H), lambda bt, tc: (0, 0)),     # b
            pl.BlockSpec((H, Sp), lambda bt, tc: (0, 0)),        # w_fc
            pl.BlockSpec((1, Sp), lambda bt, tc: (0, 0)),        # b_fc
        ],
        out_specs=pl.BlockSpec((time_chunk, batch_tile, Sp),
                               lambda bt, tc: (tc, bt, 0)),  # yt (streamed)
        scratch_shapes=[
            pltpu.VMEM((batch_tile, H), jnp.float32),            # h state
            pltpu.VMEM((batch_tile, H), jnp.float32),            # c state
            pltpu.VMEM((time_chunk, batch_tile, 4 * H), jnp.float32),  # xw
            pltpu.VMEM((time_chunk, batch_tile, H), jnp.float32),      # hall
        ],
        compiler_params=pltpu.CompilerParams(
            dimension_semantics=("parallel", "arbitrary"),
            vmem_limit_bytes=vmem_limit),
    )(x_in, w_ih, w_hh, b, w_fc, b_fc)

    yt_all = yt_pad[:T, :B, :S].transpose(1, 0, 2)                 # [B, T, S]
    yt = yt_all[:, :-1, :]                                         # [B, T-1, S]
    next_skill_ids = questions[:, 1:]                              # [B, T-1]
    pred = jnp.take_along_axis(yt, next_skill_ids[..., None], axis=2)[..., 0]
    return pred, mask, yt, yt_all


def init_dkt_params(key, emb_dim, hidden_dim, num_skills):
    """Deterministic synthetic params matching the nn.Module shapes.

    PyTorch stores weight_ih:[4H,2E], weight_hh:[4H,H], fc.weight:[S,H] with
    gate order (i, f, g, o); we keep transposed (matmul-friendly) layouts in
    that same gate order — the kernel wrapper does the (i,f,o,g) permutation.
    """
    k1, k2, k3, k4, k5, k6, k7 = jax.random.split(key, 7)
    H, E = hidden_dim, emb_dim
    klstm = 1.0 / (H ** 0.5)
    params = {
        "correct_embed": jax.random.normal(k1, (2, E), jnp.float32),
        "w_ih": jax.random.uniform(k2, (2 * E, 4 * H), jnp.float32,
                                   -klstm, klstm),
        "w_hh": jax.random.uniform(k3, (H, 4 * H), jnp.float32,
                                   -klstm, klstm),
        # b = b_ih + b_hh folded together
        "b": (jax.random.uniform(k4, (1, 4 * H), jnp.float32, -klstm, klstm)
              + jax.random.uniform(k5, (1, 4 * H), jnp.float32, -klstm, klstm)),
        "w_fc": jax.random.uniform(k6, (H, num_skills), jnp.float32,
                                   -klstm, klstm),
        "b_fc": jax.random.uniform(k7, (1, num_skills), jnp.float32,
                                   -klstm, klstm),
    }
    return params
    # NOTE: nn.LSTM dropout is a no-op for a single-layer LSTM forward.


def _lstm_fc_reference(x_tm, params):
    """Pure-JAX reference (time-major, PyTorch gate order i,f,g,o)."""
    H = params["w_hh"].shape[0]
    B = x_tm.shape[1]

    def step(carry, x_t):
        h, c = carry
        gates = x_t @ params["w_ih"] + h @ params["w_hh"] + params["b"]
        i = jax.nn.sigmoid(gates[:, 0:H])
        f = jax.nn.sigmoid(gates[:, H:2 * H])
        g = jnp.tanh(gates[:, 2 * H:3 * H])
        o = jax.nn.sigmoid(gates[:, 3 * H:4 * H])
        c = f * c + i * g
        h = o * jnp.tanh(c)
        return (h, c), h

    init = (jnp.zeros((B, H), jnp.float32), jnp.zeros((B, H), jnp.float32))
    _, hs = jax.lax.scan(step, init, x_tm)
    return jax.nn.sigmoid(hs @ params["w_fc"] + params["b_fc"])   # [T, B, S]


if __name__ == "__main__":
    B, T = 2, 8
    emb_dim, hidden_dim, num_skills = 16, 32, 16

    key = jax.random.PRNGKey(0)
    kp, kd, kq, kc = jax.random.split(key, 4)

    params = init_dkt_params(kp, emb_dim, hidden_dim, num_skills)
    dynamic_skill_embeds = jax.random.normal(kd, (num_skills, emb_dim),
                                             jnp.float32)
    questions = jax.random.randint(kq, (B, T), 0, num_skills, jnp.int32)
    correct_seq = jax.random.randint(kc, (B, T), 0, 2, jnp.int32)

    # Pure-JAX reference for the numerical check.
    skill_tm = dynamic_skill_embeds[questions.T]
    correct_tm = params["correct_embed"][correct_seq.T]
    x_tm = jnp.concatenate([skill_tm, correct_tm], axis=-1).astype(jnp.float32)
    yt_ref = _lstm_fc_reference(x_tm, params).transpose(1, 0, 2)   # [B, T, S]

    # Run 1: explicit small time_chunk (exercises T-padding + the h/c carry
    # across the sequential chunk axis).
    fwd = jax.jit(functools.partial(dkt_forward, time_chunk=3))
    pred, mask, yt, yt_all = fwd(params, dynamic_skill_embeds,
                                 questions, correct_seq)
    jax.block_until_ready((pred, mask, yt, yt_all))

    assert pred.shape == (B, T - 1)
    assert mask.shape == (B, T - 1)
    assert yt.shape == (B, T - 1, num_skills)
    assert yt_all.shape == (B, T, num_skills)
    max_err = float(jnp.max(jnp.abs(yt_all - yt_ref)))
    assert max_err < 2e-3, f"mismatch vs reference (chunked): {max_err}"

    # Run 2: default VMEM-aware chunk heuristic (single chunk at this size).
    fwd2 = jax.jit(dkt_forward)
    pred2, mask2, yt2, yt_all2 = fwd2(params, dynamic_skill_embeds,
                                      questions, correct_seq)
    jax.block_until_ready((pred2, mask2, yt2, yt_all2))
    max_err2 = float(jnp.max(jnp.abs(yt_all2 - yt_ref)))
    assert max_err2 < 2e-3, f"mismatch vs reference (default): {max_err2}"

    print("KERNEL_OK")
</pallas_src>

<mosaic_0001>
module attributes {stable_mosaic.version = 11 : i64} {
  func.func @dkt_chunk_kernel(%arg0: i32, %arg1: i32, %arg2: memref<3x8x128xf32, #tpu.memory_space<vmem>>, %arg3: memref<128x128xf32, #tpu.memory_space<vmem>>, %arg4: memref<32x128xf32, #tpu.memory_space<vmem>>, %arg5: memref<1x128xf32, #tpu.memory_space<vmem>>, %arg6: memref<32x128xf32, #tpu.memory_space<vmem>>, %arg7: memref<1x128xf32, #tpu.memory_space<vmem>>, %arg8: memref<3x8x128xf32, #tpu.memory_space<vmem>>, %arg9: memref<8x32xf32, #tpu.memory_space<vmem>>, %arg10: memref<8x32xf32, #tpu.memory_space<vmem>>, %arg11: memref<3x8x128xf32, #tpu.memory_space<vmem>>, %arg12: memref<3x8x32xf32, #tpu.memory_space<vmem>>) attributes {dimension_semantics = [#tpu.dimension_semantics<parallel>, #tpu.dimension_semantics<arbitrary>], iteration_bounds = array<i64: 1, 3>, scalar_prefetch = 0 : i64, scratch_operands = 4 : i64, tpu.core_type = #tpu.core_type<tc>, window_params = [{transform_indices = @transform_0, window_bounds = array<i64: 3, 8, 128>}, {pipeline_mode = #tpu.pipeline_mode<synchronous>, transform_indices = @transform_1, window_bounds = array<i64: 128, 128>}, {pipeline_mode = #tpu.pipeline_mode<synchronous>, transform_indices = @transform_2, window_bounds = array<i64: 32, 128>}, {pipeline_mode = #tpu.pipeline_mode<synchronous>, transform_indices = @transform_3, window_bounds = array<i64: 1, 128>}, {pipeline_mode = #tpu.pipeline_mode<synchronous>, transform_indices = @transform_4, window_bounds = array<i64: 32, 128>}, {pipeline_mode = #tpu.pipeline_mode<synchronous>, transform_indices = @transform_5, window_bounds = array<i64: 1, 128>}, {transform_indices = @transform_6, window_bounds = array<i64: 3, 8, 128>}]} {
    %c0_i32 = arith.constant 0 : i32
    %0 = arith.cmpi eq, %arg1, %c0_i32 : i32
    %1 = arith.extui %0 : i1 to i32
    %c0_i32_0 = arith.constant 0 : i32
    %2 = arith.cmpi ne, %1, %c0_i32_0 : i32
    scf.if %2 {
      %cst_51 = arith.constant 0.000000e+00 : f32
      %106 = vector.broadcast %cst_51 : f32 to vector<8x32xf32>
      %c0_52 = arith.constant 0 : index
      %c0_53 = arith.constant 0 : index
      %107 = vector.load %arg9[%c0_52, %c0_53] : memref<8x32xf32, #tpu.memory_space<vmem>>, vector<8x32xf32>
      tpu.vector_store %arg9[%c0_52, %c0_53], %106 {strides = array<i32>} : memref<8x32xf32, #tpu.memory_space<vmem>>, vector<8x32xf32>,
      %cst_54 = arith.constant 0.000000e+00 : f32
      %108 = vector.broadcast %cst_54 : f32 to vector<8x32xf32>
      %c0_55 = arith.constant 0 : index
      %c0_56 = arith.constant 0 : index
      %109 = vector.load %arg10[%c0_55, %c0_56] : memref<8x32xf32, #tpu.memory_space<vmem>>, vector<8x32xf32>
      tpu.vector_store %arg10[%c0_55, %c0_56], %108 {strides = array<i32>} : memref<8x32xf32, #tpu.memory_space<vmem>>, vector<8x32xf32>,
    } else {
    }
    %c0 = arith.constant 0 : index
    %c0_1 = arith.constant 0 : index
    %c0_2 = arith.constant 0 : index
    %3 = vector.load %arg2[%c0, %c0_1, %c0_2] : memref<3x8x128xf32, #tpu.memory_space<vmem>>, vector<3x8x128xf32>
    %4 = vector.shape_cast %3 : vector<3x8x128xf32> to vector<24x128xf32>
    %c0_3 = arith.constant 0 : index
    %c0_4 = arith.constant 0 : index
    %5 = vector.load %arg3[%c0_3, %c0_4] : memref<128x128xf32, #tpu.memory_space<vmem>>, vector<128x128xf32>
    %cst = arith.constant dense<0.000000e+00> : vector<24x128xf32>
    %6 = tpu.matmul %4, %5, %cst {dimension_numbers = #tpu.dot_dimension_numbers<[1], [0], [0], [1], [0, 0, 1, 1], [], []>} : vector<24x128xf32>, vector<128x128xf32>, vector<24x128xf32> -> vector<24x128xf32>
    %c0_5 = arith.constant 0 : index
    %c0_6 = arith.constant 0 : index
    %7 = vector.load %arg5[%c0_5, %c0_6] : memref<1x128xf32, #tpu.memory_space<vmem>>, vector<1x128xf32>
    %8 = vector.broadcast %7 : vector<1x128xf32> to vector<24x128xf32>
    %9 = arith.addf %6, %8 : vector<24x128xf32>
    %10 = vector.shape_cast %9 : vector<24x128xf32> to vector<3x8x128xf32>
    %c0_7 = arith.constant 0 : index
    %c0_8 = arith.constant 0 : index
    %c0_9 = arith.constant 0 : index
    %11 = vector.load %arg11[%c0_7, %c0_8, %c0_9] : memref<3x8x128xf32, #tpu.memory_space<vmem>>, vector<3x8x128xf32>
    tpu.vector_store %arg11[%c0_7, %c0_8, %c0_9], %10 {strides = array<i32>} : memref<3x8x128xf32, #tpu.memory_space<vmem>>, vector<3x8x128xf32>,
    %c0_10 = arith.constant 0 : index
    %c0_11 = arith.constant 0 : index
    %12 = vector.load %arg4[%c0_10, %c0_11] : memref<32x128xf32, #tpu.memory_space<vmem>>, vector<32x128xf32>
    %c0_12 = arith.constant 0 : index
    %c0_13 = arith.constant 0 : index
    %13 = vector.load %arg9[%c0_12, %c0_13] : memref<8x32xf32, #tpu.memory_space<vmem>>, vector<8x32xf32>
    %c0_14 = arith.constant 0 : index
    %c0_15 = arith.constant 0 : index
    %14 = vector.load %arg10[%c0_14, %c0_15] : memref<8x32xf32, #tpu.memory_space<vmem>>, vector<8x32xf32>
    %c0_i32_16 = arith.constant 0 : i32
    %15 = arith.index_cast %c0_i32_16 : i32 to index
    %c0_17 = arith.constant 0 : index
    %c0_18 = arith.constant 0 : index
    %16 = vector.load %arg11[%15, %c0_17, %c0_18] : memref<3x8x128xf32, #tpu.memory_space<vmem>>, vector<1x8x128xf32>
    %17 = vector.shape_cast %16 : vector<1x8x128xf32> to vector<8x128xf32>
    %cst_19 = arith.constant dense<0.000000e+00> : vector<8x128xf32>
    %18 = tpu.matmul %13, %12, %cst_19 {dimension_numbers = #tpu.dot_dimension_numbers<[1], [0], [0], [1], [0, 0, 1, 1], [], []>} : vector<8x32xf32>, vector<32x128xf32>, vector<8x128xf32> -> vector<8x128xf32>
    %19 = arith.addf %17, %18 : vector<8x128xf32>
    %20 = vector.extract_strided_slice %19 {offsets = [0, 0], sizes = [8, 96], strides = [1, 1]} : vector<8x128xf32> to vector<8x96xf32>
    %21 = arith.negf %20 : vector<8x96xf32>
    %22 = math.exp %21 : vector<8x96xf32>
    %cst_20 = arith.constant 1.000000e+00 : f32
    %23 = vector.broadcast %cst_20 : f32 to vector<8x96xf32>
    %24 = arith.addf %23, %22 : vector<8x96xf32>
    %25 = arith.divf %23, %24 : vector<8x96xf32>
    %26 = vector.extract_strided_slice %19 {offsets = [0, 96], sizes = [8, 32], strides = [1, 1]} : vector<8x128xf32> to vector<8x32xf32>
    %27 = math.tanh %26 : vector<8x32xf32>
    %28 = vector.extract_strided_slice %25 {offsets = [0, 0], sizes = [8, 32], strides = [1, 1]} : vector<8x96xf32> to vector<8x32xf32>
    %29 = vector.extract_strided_slice %25 {offsets = [0, 32], sizes = [8, 32], strides = [1, 1]} : vector<8x96xf32> to vector<8x32xf32>
    %30 = vector.extract_strided_slice %25 {offsets = [0, 64], sizes = [8, 32], strides = [1, 1]} : vector<8x96xf32> to vector<8x32xf32>
    %31 = arith.mulf %29, %14 : vector<8x32xf32>
    %32 = arith.mulf %28, %27 : vector<8x32xf32>
    %33 = arith.addf %31, %32 : vector<8x32xf32>
    %34 = math.tanh %33 : vector<8x32xf32>
    %35 = arith.mulf %30, %34 : vector<8x32xf32>
    %36 = arith.index_cast %c0_i32_16 : i32 to index
    %c0_21 = arith.constant 0 : index
    %c0_22 = arith.constant 0 : index
    %37 = vector.load %arg12[%36, %c0_21, %c0_22] : memref<3x8x32xf32, #tpu.memory_space<vmem>>, vector<1x8x32xf32>
    %38 = vector.shape_cast %37 : vector<1x8x32xf32> to vector<8x32xf32>
    %39 = vector.shape_cast %35 : vector<8x32xf32> to vector<1x8x32xf32>
    tpu.vector_store %arg12[%36, %c0_21, %c0_22], %39 {strides = array<i32>} : memref<3x8x32xf32, #tpu.memory_space<vmem>>, vector<1x8x32xf32>,
    %c1_i32 = arith.constant 1 : i32
    %40 = arith.index_cast %c1_i32 : i32 to index
    %c0_23 = arith.constant 0 : index
    %c0_24 = arith.constant 0 : index
    %41 = vector.load %arg11[%40, %c0_23, %c0_24] : memref<3x8x128xf32, #tpu.memory_space<vmem>>, vector<1x8x128xf32>
    %42 = vector.shape_cast %41 : vector<1x8x128xf32> to vector<8x128xf32>
    %cst_25 = arith.constant dense<0.000000e+00> : vector<8x128xf32>
    %43 = tpu.matmul %35, %12, %cst_25 {dimension_numbers = #tpu.dot_dimension_numbers<[1], [0], [0], [1], [0, 0, 1, 1], [], []>} : vector<8x32xf32>, vector<32x128xf32>, vector<8x128xf32> -> vector<8x128xf32>
    %44 = arith.addf %42, %43 : vector<8x128xf32>
    %45 = vector.extract_strided_slice %44 {offsets = [0, 0], sizes = [8, 96], strides = [1, 1]} : vector<8x128xf32> to vector<8x96xf32>
    %46 = arith.negf %45 : vector<8x96xf32>
    %47 = math.exp %46 : vector<8x96xf32>
    %cst_26 = arith.constant 1.000000e+00 : f32
    %48 = vector.broadcast %cst_26 : f32 to vector<8x96xf32>
    %49 = arith.addf %48, %47 : vector<8x96xf32>
    %50 = arith.divf %48, %49 : vector<8x96xf32>
    %51 = vector.extract_strided_slice %44 {offsets = [0, 96], sizes = [8, 32], strides = [1, 1]} : vector<8x128xf32> to vector<8x32xf32>
    %52 = math.tanh %51 : vector<8x32xf32>
    %53 = vector.extract_strided_slice %50 {offsets = [0, 0], sizes = [8, 32], strides = [1, 1]} : vector<8x96xf32> to vector<8x32xf32>
    %54 = vector.extract_strided_slice %50 {offsets = [0, 32], sizes = [8, 32], strides = [1, 1]} : vector<8x96xf32> to vector<8x32xf32>
    %55 = vector.extract_strided_slice %50 {offsets = [0, 64], sizes = [8, 32], strides = [1, 1]} : vector<8x96xf32> to vector<8x32xf32>
    %56 = arith.mulf %54, %33 : vector<8x32xf32>
    %57 = arith.mulf %53, %52 : vector<8x32xf32>
    %58 = arith.addf %56, %57 : vector<8x32xf32>
    %59 = math.tanh %58 : vector<8x32xf32>
    %60 = arith.mulf %55, %59 : vector<8x32xf32>
    %61 = arith.index_cast %c1_i32 : i32 to index
    %c0_27 = arith.constant 0 : index
    %c0_28 = arith.constant 0 : index
    %62 = vector.load %arg12[%61, %c0_27, %c0_28] : memref<3x8x32xf32, #tpu.memory_space<vmem>>, vector<1x8x32xf32>
    %63 = vector.shape_cast %62 : vector<1x8x32xf32> to vector<8x32xf32>
    %64 = vector.shape_cast %60 : vector<8x32xf32> to vector<1x8x32xf32>
    tpu.vector_store %arg12[%61, %c0_27, %c0_28], %64 {strides = array<i32>} : memref<3x8x32xf32, #tpu.memory_space<vmem>>, vector<1x8x32xf32>,
    %c2_i32 = arith.constant 2 : i32
    %65 = arith.index_cast %c2_i32 : i32 to index
    %c0_29 = arith.constant 0 : index
    %c0_30 = arith.constant 0 : index
    %66 = vector.load %arg11[%65, %c0_29, %c0_30] : memref<3x8x128xf32, #tpu.memory_space<vmem>>, vector<1x8x128xf32>
    %67 = vector.shape_cast %66 : vector<1x8x128xf32> to vector<8x128xf32>
    %cst_31 = arith.constant dense<0.000000e+00> : vector<8x128xf32>
    %68 = tpu.matmul %60, %12, %cst_31 {dimension_numbers = #tpu.dot_dimension_numbers<[1], [0], [0], [1], [0, 0, 1, 1], [], []>} : vector<8x32xf32>, vector<32x128xf32>, vector<8x128xf32> -> vector<8x128xf32>
    %69 = arith.addf %67, %68 : vector<8x128xf32>
    %70 = vector.extract_strided_slice %69 {offsets = [0, 0], sizes = [8, 96], strides = [1, 1]} : vector<8x128xf32> to vector<8x96xf32>
    %71 = arith.negf %70 : vector<8x96xf32>
    %72 = math.exp %71 : vector<8x96xf32>
    %cst_32 = arith.constant 1.000000e+00 : f32
    %73 = vector.broadcast %cst_32 : f32 to vector<8x96xf32>
    %74 = arith.addf %73, %72 : vector<8x96xf32>
    %75 = arith.divf %73, %74 : vector<8x96xf32>
    %76 = vector.extract_strided_slice %69 {offsets = [0, 96], sizes = [8, 32], strides = [1, 1]} : vector<8x128xf32> to vector<8x32xf32>
    %77 = math.tanh %76 : vector<8x32xf32>
    %78 = vector.extract_strided_slice %75 {offsets = [0, 0], sizes = [8, 32], strides = [1, 1]} : vector<8x96xf32> to vector<8x32xf32>
    %79 = vector.extract_strided_slice %75 {offsets = [0, 32], sizes = [8, 32], strides = [1, 1]} : vector<8x96xf32> to vector<8x32xf32>
    %80 = vector.extract_strided_slice %75 {offsets = [0, 64], sizes = [8, 32], strides = [1, 1]} : vector<8x96xf32> to vector<8x32xf32>
    %81 = arith.mulf %79, %58 : vector<8x32xf32>
    %82 = arith.mulf %78, %77 : vector<8x32xf32>
    %83 = arith.addf %81, %82 : vector<8x32xf32>
    %84 = math.tanh %83 : vector<8x32xf32>
    %85 = arith.mulf %80, %84 : vector<8x32xf32>
    %86 = arith.index_cast %c2_i32 : i32 to index
    %c0_33 = arith.constant 0 : index
    %c0_34 = arith.constant 0 : index
    %87 = vector.load %arg12[%86, %c0_33, %c0_34] : memref<3x8x32xf32, #tpu.memory_space<vmem>>, vector<1x8x32xf32>
    %88 = vector.shape_cast %87 : vector<1x8x32xf32> to vector<8x32xf32>
    %89 = vector.shape_cast %85 : vector<8x32xf32> to vector<1x8x32xf32>
    tpu.vector_store %arg12[%86, %c0_33, %c0_34], %89 {strides = array<i32>} : memref<3x8x32xf32, #tpu.memory_space<vmem>>, vector<1x8x32xf32>,
    %c3_i32 = arith.constant 3 : i32
    %c0_35 = arith.constant 0 : index
    %c0_36 = arith.constant 0 : index
    %90 = vector.load %arg9[%c0_35, %c0_36] : memref<8x32xf32, #tpu.memory_space<vmem>>, vector<8x32xf32>
    tpu.vector_store %arg9[%c0_35, %c0_36], %85 {strides = array<i32>} : memref<8x32xf32, #tpu.memory_space<vmem>>, vector<8x32xf32>,
    %c0_37 = arith.constant 0 : index
    %c0_38 = arith.constant 0 : index
    %91 = vector.load %arg10[%c0_37, %c0_38] : memref<8x32xf32, #tpu.memory_space<vmem>>, vector<8x32xf32>
    tpu.vector_store %arg10[%c0_37, %c0_38], %83 {strides = array<i32>} : memref<8x32xf32, #tpu.memory_space<vmem>>, vector<8x32xf32>,
    %c0_39 = arith.constant 0 : index
    %c0_40 = arith.constant 0 : index
    %c0_41 = arith.constant 0 : index
    %92 = vector.load %arg12[%c0_39, %c0_40, %c0_41] : memref<3x8x32xf32, #tpu.memory_space<vmem>>, vector<3x8x32xf32>
    %93 = vector.shape_cast %92 : vector<3x8x32xf32> to vector<24x32xf32>
    %c0_42 = arith.constant 0 : index
    %c0_43 = arith.constant 0 : index
    %94 = vector.load %arg6[%c0_42, %c0_43] : memref<32x128xf32, #tpu.memory_space<vmem>>, vector<32x128xf32>
    %cst_44 = arith.constant dense<0.000000e+00> : vector<24x128xf32>
    %95 = tpu.matmul %93, %94, %cst_44 {dimension_numbers = #tpu.dot_dimension_numbers<[1], [0], [0], [1], [0, 0, 1, 1], [], []>} : vector<24x32xf32>, vector<32x128xf32>, vector<24x128xf32> -> vector<24x128xf32>
    %c0_45 = arith.constant 0 : index
    %c0_46 = arith.constant 0 : index
    %96 = vector.load %arg7[%c0_45, %c0_46] : memref<1x128xf32, #tpu.memory_space<vmem>>, vector<1x128xf32>
    %97 = vector.broadcast %96 : vector<1x128xf32> to vector<24x128xf32>
    %98 = arith.addf %95, %97 : vector<24x128xf32>
    %99 = arith.negf %98 : vector<24x128xf32>
    %100 = math.exp %99 : vector<24x128xf32>
    %cst_47 = arith.constant 1.000000e+00 : f32
    %101 = vector.broadcast %cst_47 : f32 to vector<24x128xf32>
    %102 = arith.addf %101, %100 : vector<24x128xf32>
    %103 = arith.divf %101, %102 : vector<24x128xf32>
    %104 = vector.shape_cast %103 : vector<24x128xf32> to vector<3x8x128xf32>
    %c0_48 = arith.constant 0 : index
    %c0_49 = arith.constant 0 : index
    %c0_50 = arith.constant 0 : index
    %105 = vector.load %arg8[%c0_48, %c0_49, %c0_50] : memref<3x8x128xf32, #tpu.memory_space<vmem>>, vector<3x8x128xf32>
    tpu.vector_store %arg8[%c0_48, %c0_49, %c0_50], %104 {strides = array<i32>} : memref<3x8x128xf32, #tpu.memory_space<vmem>>, vector<3x8x128xf32>,
    return
  }
  func.func @transform_0(%arg0: i32, %arg1: i32) -> (i32, i32, i32) {
    %c0_i32 = arith.constant 0 : i32
    %c0_i32_0 = arith.constant 0 : i32
    return %arg1, %arg0, %c0_i32 : i32, i32, i32
  }
  func.func @transform_1(%arg0: i32, %arg1: i32) -> (i32, i32) {
    %c0_i32 = arith.constant 0 : i32
    %c0_i32_0 = arith.constant 0 : i32
    %c0_i32_1 = arith.constant 0 : i32
    return %c0_i32, %c0_i32_0 : i32, i32
  }
  func.func @transform_2(%arg0: i32, %arg1: i32) -> (i32, i32) {
    %c0_i32 = arith.constant 0 : i32
    %c0_i32_0 = arith.constant 0 : i32
    %c0_i32_1 = arith.constant 0 : i32
    return %c0_i32, %c0_i32_0 : i32, i32
  }
  func.func @transform_3(%arg0: i32, %arg1: i32) -> (i32, i32) {
    %c0_i32 = arith.constant 0 : i32
    %c0_i32_0 = arith.constant 0 : i32
    %c0_i32_1 = arith.constant 0 : i32
    return %c0_i32, %c0_i32_0 : i32, i32
  }
  func.func @transform_4(%arg0: i32, %arg1: i32) -> (i32, i32) {
    %c0_i32 = arith.constant 0 : i32
    %c0_i32_0 = arith.constant 0 : i32
    %c0_i32_1 = arith.constant 0 : i32
    return %c0_i32, %c0_i32_0 : i32, i32
  }
  func.func @transform_5(%arg0: i32, %arg1: i32) -> (i32, i32) {
    %c0_i32 = arith.constant 0 : i32
    %c0_i32_0 = arith.constant 0 : i32
    %c0_i32_1 = arith.constant 0 : i32
    return %c0_i32, %c0_i32_0 : i32, i32
  }
  func.func @transform_6(%arg0: i32, %arg1: i32) -> (i32, i32, i32) {
    %c0_i32 = arith.constant 0 : i32
    %c0_i32_0 = arith.constant 0 : i32
    return %arg1, %arg0, %c0_i32 : i32, i32, i32
  }
}

</mosaic_0001>

<llo_original>
// kernel: dkt_forward.1
$region0: #{dkt_forward.1}
  #allocation0 [shape = 'u32[]', space=smem, size = 0x4, offset = 0x4, fixed_abs, tag = 'smem constant byte address 0x4 - core index']
  #allocation1 [shape = 'u32[144,128]{1,0:T(1,128)}', space=vmem, size = 0x12000, scoped, tag = 'internal scratch']
  #allocation2 [shape = 'f32[8,32]{1,0:T(8,128)}', space=vmem, size = 0x1000, scoped, tag = 'scratch operand']
  #allocation3 [shape = 'f32[8,32]{1,0:T(8,128)}', space=vmem, size = 0x1000, scoped, tag = 'scratch operand']
  #allocation4 [shape = 'f32[3,8,128]{2,1,0:T(8,128)}', space=vmem, size = 0x3000, scoped, tag = 'scratch operand']
  #allocation5 [shape = 'f32[3,8,32]{2,1,0:T(8,128)}', space=vmem, size = 0x3000, scoped, tag = 'scratch operand']
  %s0 = inlined_call_operand.vmem [shape: f32[9,8,128], index: 0, kind: input, shape index: {}]
  %s1 = inlined_call_operand.vmem [shape: f32[128,128], index: 1, kind: input, shape index: {}]
  %s2 = inlined_call_operand.vmem [shape: f32[32,128], index: 2, kind: input, shape index: {}]
  %s3 = inlined_call_operand.vmem [shape: f32[1,128], index: 3, kind: input, shape index: {}]
  %s4 = inlined_call_operand.vmem [shape: f32[32,128], index: 4, kind: input, shape index: {}]
  %s5 = inlined_call_operand.vmem [shape: f32[1,128], index: 5, kind: input, shape index: {}]
  %s6 = inlined_call_operand.vmem [shape: f32[9,8,128], index: 6, kind: output, shape index: {}]
  %s7 = sld [smem:[#allocation0]]
  $region61: #{dkt_forward.1} parent=0
    _
  %s9 = ssub.s32 1, %s7
  %s10 = scalar_select 0, %s9, %s7
  loop: start=0, step=1, limit=5
  $region2: #{dkt_forward.1} parent=0 // loop_pre_header
    _
  $region3: #{dkt_forward.1} parent=0 // loop_header
    %s12 = sphi 0, %s16
    %p13 = scmp.ge.s32.totalorder %s12, 5
    %s19 = sphi 0, %s31
    %s20 = sphi 0, %s27
    %s21 = sphi 0, %s19
    %s22 = sphi 0, %s20
    %s23 = sphi 0, %s21
    %s24 = sphi 0, %s22
    %s36 = sphi 0, %s38
    %s39 = sphi 0, %s36
    %s40 = sphi 0, %s39
    %s56 = sphi 0, %s40
    %s60 = sphi 0, %s60
    %s62 = sphi 0, %s60
    %s63 = sphi 0, %s62
    %s77 = sphi 0, %s63
    %s81 = sphi 0, %s81
    %s83 = sphi 0, %s81
    %s84 = sphi 0, %s83
    %s98 = sphi 0, %s84
    %s102 = sphi 0, %s102
    %s104 = sphi 0, %s102
    %s105 = sphi 0, %s104
    %s119 = sphi 0, %s105
    %s123 = sphi 0, %s123
    %s125 = sphi 0, %s123
    %s126 = sphi 0, %s125
    %s140 = sphi 0, %s126
    %s144 = sphi 0, %s144
    %s146 = sphi 0, %s144
    %s147 = sphi 0, %s146
    %s161 = sphi 0, %s147
    %s169 = sphi 0, %s171
    %s172 = sphi 0, %s169
    %s173 = sphi 0, %s172
    %s189 = sphi 0, %s173
  $region4: #{dkt_forward.1} parent=0 // loop_header_branch
    %15 = sbr.rel (%p13) target = $region8
  $region5: #{dkt_forward.1} parent=0 // loop_body
    %s17 = ssub.s32 %s12, 1
    %s18 = ssub.s32 %s12, 2
    %s25 = sadd.s32 1, %s20
    %p26 = scmp.ge.s32.totalorder %s25, 3
    %s27 = scalar_select %p26, 0, %s25
    %s28 = sadd.s32 1, %s19
    %s29 = scalar_select %p26, %s28, %s19
    %p30 = scmp.ge.s32.totalorder %s29, 1
    %s31 = scalar_select %p30, 0, %s29
    %s32 = ssub.s32 %s20, %s27
    %s33 = ssub.s32 %s19, %s31
    %s34 = sor.u32 %s32, %s33
    %p35 = scmp.eq.s32.totalorder %s34, 0
    %s37 = sadd.s32 %s36, 1
    %s38 = scalar_select %p35, %s36, %s37
    %p41 = pneg %p35
    %p42 = scmp.eq.s32.totalorder %s12, 2
    %p43 = por %p41, %p42
    %p44 = scmp.ne.s32.totalorder %s36, %s39
    %p45 = scmp.eq.s32.totalorder %s12, 0
    %p46 = por %p44, %p45
    %p47 = scmp.ne.s32.totalorder %s36, %s39
    %p48 = scmp.eq.s32.totalorder %s17, 2
    %p49 = por %p47, %p48
    %p50 = scmp.ne.s32.totalorder %s39, %s40
    %p51 = scmp.eq.s32.totalorder %s17, 0
    %p52 = por %p50, %p51
    %p53 = scmp.ne.s32.totalorder %s39, %s40
    %p54 = scmp.eq.s32.totalorder %s18, 2
    %p55 = por %p53, %p54
    %p57 = scmp.ne.s32.totalorder %s40, %s56
    %p58 = scmp.eq.s32.totalorder %s18, 0
    %p59 = por %p57, %p58
    %s61 = sadd.s32 %s60, 1
    %p64 = scmp.eq.s32.totalorder %s12, 2
    %p65 = scmp.ne.s32.totalorder %s60, %s62
    %p66 = scmp.eq.s32.totalorder %s12, 0
    %p67 = por %p65, %p66
    %p68 = scmp.ne.s32.totalorder %s60, %s62
    %p69 = scmp.eq.s32.totalorder %s17, 2
    %p70 = por %p68, %p69
    %p71 = scmp.ne.s32.totalorder %s62, %s63
    %p72 = scmp.eq.s32.totalorder %s17, 0
    %p73 = por %p71, %p72
    %p74 = scmp.ne.s32.totalorder %s62, %s63
    %p75 = scmp.eq.s32.totalorder %s18, 2
    %p76 = por %p74, %p75
    %p78 = scmp.ne.s32.totalorder %s63, %s77
    %p79 = scmp.eq.s32.totalorder %s18, 0
    %p80 = por %p78, %p79
    %s82 = sadd.s32 %s81, 1
    %p85 = scmp.eq.s32.totalorder %s12, 2
    %p86 = scmp.ne.s32.totalorder %s81, %s83
    %p87 = scmp.eq.s32.totalorder %s12, 0
    %p88 = por %p86, %p87
    %p89 = scmp.ne.s32.totalorder %s81, %s83
    %p90 = scmp.eq.s32.totalorder %s17, 2
    %p91 = por %p89, %p90
    %p92 = scmp.ne.s32.totalorder %s83, %s84
    %p93 = scmp.eq.s32.totalorder %s17, 0
    %p94 = por %p92, %p93
    %p95 = scmp.ne.s32.totalorder %s83, %s84
    %p96 = scmp.eq.s32.totalorder %s18, 2
    %p97 = por %p95, %p96
    %p99 = scmp.ne.s32.totalorder %s84, %s98
    %p100 = scmp.eq.s32.totalorder %s18, 0
    %p101 = por %p99, %p100
    %s103 = sadd.s32 %s102, 1
    %p106 = scmp.eq.s32.totalorder %s12, 2
    %p107 = scmp.ne.s32.totalorder %s102, %s104
    %p108 = scmp.eq.s32.totalorder %s12, 0
    %p109 = por %p107, %p108
    %p110 = scmp.ne.s32.totalorder %s102, %s104
    %p111 = scmp.eq.s32.totalorder %s17, 2
    %p112 = por %p110, %p111
    %p113 = scmp.ne.s32.totalorder %s104, %s105
    %p114 = scmp.eq.s32.totalorder %s17, 0
    %p115 = por %p113, %p114
    %p116 = scmp.ne.s32.totalorder %s104, %s105
    %p117 = scmp.eq.s32.totalorder %s18, 2
    %p118 = por %p116, %p117
    %p120 = scmp.ne.s32.totalorder %s105, %s119
    %p121 = scmp.eq.s32.totalorder %s18, 0
    %p122 = por %p120, %p121
    %s124 = sadd.s32 %s123, 1
    %p127 = scmp.eq.s32.totalorder %s12, 2
    %p128 = scmp.ne.s32.totalorder %s123, %s125
    %p129 = scmp.eq.s32.totalorder %s12, 0
    %p130 = por %p128, %p129
    %p131 = scmp.ne.s32.totalorder %s123, %s125
    %p132 = scmp.eq.s32.totalorder %s17, 2
    %p133 = por %p131, %p132
    %p134 = scmp.ne.s32.totalorder %s125, %s126
    %p135 = scmp.eq.s32.totalorder %s17, 0
    %p136 = por %p134, %p135
    %p137 = scmp.ne.s32.totalorder %s125, %s126
    %p138 = scmp.eq.s32.totalorder %s18, 2
    %p139 = por %p137, %p138
    %p141 = scmp.ne.s32.totalorder %s126, %s140
    %p142 = scmp.eq.s32.totalorder %s18, 0
    %p143 = por %p141, %p142
    %s145 = sadd.s32 %s144, 1
    %p148 = scmp.eq.s32.totalorder %s12, 2
    %p149 = scmp.ne.s32.totalorder %s144, %s146
    %p150 = scmp.eq.s32.totalorder %s12, 0
    %p151 = por %p149, %p150
    %p152 = scmp.ne.s32.totalorder %s144, %s146
    %p153 = scmp.eq.s32.totalorder %s17, 2
    %p154 = por %p152, %p153
    %p155 = scmp.ne.s32.totalorder %s146, %s147
    %p156 = scmp.eq.s32.totalorder %s17, 0
    %p157 = por %p155, %p156
    %p158 = scmp.ne.s32.totalorder %s146, %s147
    %p159 = scmp.eq.s32.totalorder %s18, 2
    %p160 = por %p158, %p159
    %p162 = scmp.ne.s32.totalorder %s147, %s161
    %p163 = scmp.eq.s32.totalorder %s18, 0
    %p164 = por %p162, %p163
    %s165 = ssub.s32 %s20, %s27
    %s166 = ssub.s32 %s19, %s31
    %s167 = sor.u32 %s165, %s166
    %p168 = scmp.eq.s32.totalorder %s167, 0
    %s170 = sadd.s32 %s169, 1
    %s171 = scalar_select %p168, %s169, %s170
    %p174 = pneg %p168
    %p175 = scmp.eq.s32.totalorder %s12, 2
    %p176 = por %p174, %p175
    %p177 = scmp.ne.s32.totalorder %s169, %s172
    %p178 = scmp.eq.s32.totalorder %s12, 0
    %p179 = por %p177, %p178
    %p180 = scmp.ne.s32.totalorder %s169, %s172
    %p181 = scmp.eq.s32.totalorder %s17, 2
    %p182 = por %p180, %p181
    %p183 = scmp.ne.s32.totalorder %s172, %s173
    %p184 = scmp.eq.s32.totalorder %s17, 0
    %p185 = por %p183, %p184
    %p186 = scmp.ne.s32.totalorder %s172, %s173
    %p187 = scmp.eq.s32.totalorder %s18, 2
    %p188 = por %p186, %p187
    %p190 = scmp.ne.s32.totalorder %s173, %s189
    %p191 = scmp.eq.s32.totalorder %s18, 0
    %p192 = por %p190, %p191
    %p193 = scmp.le.s32.totalorder 1, %s12
    %p194 = scmp.lt.s32.totalorder %s12, 4
    %p195 = pnand %p193, %p194
    %p196 = pneg %p195
    // Predicated region
    $region9: #{dkt_forward.1} parent=5 // pred_check
      _
    $region10: #{dkt_forward.1} parent=5 // pred_check_branch
      %198 = sbr.rel (%p195) target = $region12
    $region11: #{dkt_forward.1} parent=5 // pred_region
      %s199 = ssub.s32 %s12, 1
      // Predicated region
      $region13: #{dkt_forward.1} parent=11 // pred_check
        %p200 = pneg %p73
      $region14: #{dkt_forward.1} parent=11 // pred_check_branch
        %202 = sbr.rel (%p200) target = $region16
      $region15: #{dkt_forward.1} parent=11 // pred_region
        _
      $region16: #{dkt_forward.1} parent=11 // pred_fallthru
        _
      // Predicated region
      $region17: #{dkt_forward.1} parent=11 // pred_check
        %p203 = pneg %p94
      $region18: #{dkt_forward.1} parent=11 // pred_check_branch
        %205 = sbr.rel (%p203) target = $region20
      $region19: #{dkt_forward.1} parent=11 // pred_region
        _
      $region20: #{dkt_forward.1} parent=11 // pred_fallthru
        _
      // Predicated region
      $region21: #{dkt_forward.1} parent=11 // pred_check
        %p206 = pneg %p115
      $region22: #{dkt_forward.1} parent=11 // pred_check_branch
        %208 = sbr.rel (%p206) target = $region24
      $region23: #{dkt_forward.1} parent=11 // pred_region
        _
      $region24: #{dkt_forward.1} parent=11 // pred_fallthru
        _
      // Predicated region
      $region25: #{dkt_forward.1} parent=11 // pred_check
        %p209 = pneg %p136
      $region26: #{dkt_forward.1} parent=11 // pred_check_branch
        %211 = sbr.rel (%p209) target = $region28
      $region27: #{dkt_forward.1} parent=11 // pred_region
        _
      $region28: #{dkt_forward.1} parent=11 // pred_fallthru
        _
      // Predicated region
      $region29: #{dkt_forward.1} parent=11 // pred_check
        %p212 = pneg %p157
      $region30: #{dkt_forward.1} parent=11 // pred_check_branch
        %214 = sbr.rel (%p212) target = $region32
      $region31: #{dkt_forward.1} parent=11 // pred_region
        _
      $region32: #{dkt_forward.1} parent=11 // pred_fallthru
        _
    $region12: #{dkt_forward.1} parent=5 // pred_fallthru
      _
    %p215 = scmp.lt.s32.totalorder %s12, 3
    // Predicated region
    $region33: #{dkt_forward.1} parent=5 // pred_check
      %p216 = pneg %p215
    $region34: #{dkt_forward.1} parent=5 // pred_check_branch
      %218 = sbr.rel (%p216) target = $region36
    $region35: #{dkt_forward.1} parent=5 // pred_region
      // Predicated region
      $region37: #{dkt_forward.1} parent=35 // pred_check
        %p219 = pneg %p46
      $region38: #{dkt_forward.1} parent=35 // pred_check_branch
        %221 = sbr.rel (%p219) target = $region40
      $region39: #{dkt_forward.1} parent=35 // pred_region
        %s222 = smul.u32 3, %s20
        %p223 = scmp.lt.s32.totalorder %s222, 8
        %s224 = scalar_select %p223, %s222, 8
        %p225 = scmp.lt.s32.totalorder %s19, 0
        %s226 = scalar_select %p225, %s19, 0
        %s227 = sadd.s32 %s226, %s224
        %s228 = smul.addr %s227, 8
        %s229 = scalar_lea.vmem %s0, %s228
        %s230 = smul.u32 3, %s20
      $region40: #{dkt_forward.1} parent=35 // pred_fallthru
        _
    $region36: #{dkt_forward.1} parent=5 // pred_fallthru
      _
    %p231 = scmp.le.s32.totalorder 1, %s12
    %p232 = scmp.lt.s32.totalorder %s12, 4
    %p233 = pnand %p231, %p232
    %p234 = pneg %p233
    // Predicated region
    $region41: #{dkt_forward.1} parent=5 // pred_check
      _
    $region42: #{dkt_forward.1} parent=5 // pred_check_branch
      %236 = sbr.rel (%p233) target = $region44
    $region43: #{dkt_forward.1} parent=5 // pred_region
      %s237 = ssub.s32 %s12, 1
      %s238 = smul.u32 3, %s22
      %p239 = scmp.lt.s32.totalorder %s238, 8
      %s240 = scalar_select %p239, %s238, 8
      %p241 = scmp.lt.s32.totalorder %s21, 0
      %s242 = scalar_select %p241, %s21, 0
      %s243 = sadd.s32 %s242, %s240
      %s244 = smul.addr %s243, 8
      %s245 = scalar_lea.vmem %s0, %s244
      %p246 = pneg %p52
      %p247 = pneg %p49
      %p248 = pneg %p73
      %p249 = pneg %p70
      %p250 = pneg %p94
      %p251 = pneg %p91
      %p252 = pneg %p115
      %p253 = pneg %p112
      %p254 = pneg %p136
      %p255 = pneg %p133
      %p256 = pneg %p157
      %p257 = pneg %p154
      %p258 = pneg %p185
      %p259 = pneg %p182
      %s260 = smul.u32 3, %s22
      %p261 = scmp.lt.s32.totalorder %s260, 8
      %s262 = scalar_select %p261, %s260, 8
      %p263 = scmp.lt.s32.totalorder %s21, 0
      %s264 = scalar_select %p263, %s21, 0
      %s265 = sadd.s32 %s264, %s262
      %s266 = smul.addr %s265, 8
      %s267 = scalar_lea.vmem %s6, %s266
      %s268 = smul.u32 3, %s22
      %p269 = scmp.lt.s32.totalorder %s268, 8
      %s270 = scalar_select %p269, %s268, 8
      %p271 = scmp.lt.s32.totalorder %s21, 0
      %s272 = scalar_select %p271, %s21, 0
      %s273 = sadd.s32 %s272, %s270
      %s274 = smul.addr %s273, 8
      %s275 = scalar_lea.vmem %s0, %s274
      %s276 = smul.u32 3, %s22
      %s277 = smul.u32 3, %s22
      %p278 = scmp.lt.s32.totalorder %s277, 8
      %s279 = scalar_select %p278, %s277, 8
      %p280 = scmp.lt.s32.totalorder %s21, 0
      %s281 = scalar_select %p280, %s21, 0
      %s282 = sadd.s32 %s281, %s279
      %s283 = smul.addr %s282, 8
      %s284 = scalar_lea.vmem %s6, %s283
      %s285 = smul.u32 3, %s22
      %p286 = scmp.eq.s32.totalorder %s22, 0
      // Predicated region
      $region45: #{dkt_forward.1} parent=43 // pred_check
        %p287 = pneg %p286
      $region46: #{dkt_forward.1} parent=43 // pred_check_branch
        %289 = sbr.rel (%p287) target = $region48
      $region47: #{dkt_forward.1} parent=43 // pred_region
        %vm290 = vcmask 261120
        %291 = vst.msk [vmem:[#allocation2] sm:$0xff] %vm290, 0.0
        %292 = vst.msk [vmem:[#allocation3] sm:$0xff] %vm290, 0.0
      $region48: #{dkt_forward.1} parent=43 // pred_fallthru
        _
      %v293 = vld [vmem:[%s275] sm:$0xff]
      %v294 = vld [vmem:[%s275 + $0x8] sm:$0xff]
      %v295 = vld [vmem:[%s275 + $0x10] sm:$0xff]
      %v296 = vld [vmem:[%s1] sm:$0xff]
      %v297 = vld [vmem:[%s1 + $0x8] sm:$0xff]
      %v298 = vld [vmem:[%s1 + $0x10] sm:$0xff]
      %v299 = vld [vmem:[%s1 + $0x18] sm:$0xff]
      %v300 = vld [vmem:[%s1 + $0x20] sm:$0xff]
      %v301 = vld [vmem:[%s1 + $0x28] sm:$0xff]
      %v302 = vld [vmem:[%s1 + $0x30] sm:$0xff]
      %v303 = vld [vmem:[%s1 + $0x38] sm:$0xff]
      %v304 = vld [vmem:[%s1 + $0x40] sm:$0xff]
      %v305 = vld [vmem:[%s1 + $0x48] sm:$0xff]
      %v306 = vld [vmem:[%s1 + $0x50] sm:$0xff]
      %v307 = vld [vmem:[%s1 + $0x58] sm:$0xff]
      %v308 = vld [vmem:[%s1 + $0x60] sm:$0xff]
      %v309 = vld [vmem:[%s1 + $0x68] sm:$0xff]
      %v310 = vld [vmem:[%s1 + $0x70] sm:$0xff]
      %v311 = vld [vmem:[%s1 + $0x78] sm:$0xff]
      %v312 = vld [vmem:[%s3] sm:$0x1]
      %v314 = vlaneseq
      %v315 = vshrl.u32 %v314, 7
      %v316 = vsub.s32 0, %v315
      %v317 = vrot.slane %v312, %v316
      %319 = vmatprep.subr.mxu0 0.0
      %320 = vmatpush1.msra.mxu0 %v296
      %321 = vmatprep.subr.mxu0 0.0
      %322 = vmatpush1.msra.mxu0 %v297
      %323 = vmatprep.subr.mxu0 0.0
      %324 = vmatpush1.msra.mxu0 %v298
      %325 = vmatprep.subr.mxu0 0.0
      %326 = vmatpush1.msra.mxu0 %v299
      %327 = vmatprep.subr.mxu0 0.0
      %328 = vmatpush1.msra.mxu0 %v300
      %329 = vmatprep.subr.mxu0 0.0
      %330 = vmatpush1.msra.mxu0 %v301
      %331 = vmatprep.subr.mxu0 0.0
      %332 = vmatpush1.msra.mxu0 %v302
      %333 = vmatprep.subr.mxu0 0.0
      %334 = vmatpush1.msra.mxu0 %v303
      %335 = vmatprep.subr.mxu0 0.0
      %336 = vmatpush1.msra.mxu0 %v304
      %337 = vmatprep.subr.mxu0 0.0
      %338 = vmatpush1.msra.mxu0 %v305
      %339 = vmatprep.subr.mxu0 0.0
      %340 = vmatpush1.msra.mxu0 %v306
      %341 = vmatprep.subr.mxu0 0.0
      %342 = vmatpush1.msra.mxu0 %v307
      %343 = vmatprep.subr.mxu0 0.0
      %344 = vmatpush1.msra.mxu0 %v308
      %345 = vmatprep.subr.mxu0 0.0
      %346 = vmatpush1.msra.mxu0 %v309
      %347 = vmatprep.subr.mxu0 0.0
      %348 = vmatpush1.msra.mxu0 %v310
      %349 = vmatprep.subr.mxu0 0.0
      %350 = vmatpush1.msra.mxu0 %v311
      %351 = vmatprep.subr.mxu0 0.0
      %352 = vmatpush1.msra.mxu0 0.0
      %353 = vmatprep.subr.mxu0 0.0
      %354 = vmatpush1.msra.mxu0 0.0
      %355 = vmatprep.subr.mxu0 0.0
      %356 = vmatpush1.msra.mxu0 0.0
      %357 = vmatprep.subr.mxu0 0.0
      %358 = vmatpush1.msra.mxu0 0.0
      %359 = vmatprep.subr.mxu0 0.0
      %360 = vmatpush1.msra.mxu0 0.0
      %361 = vmatprep.subr.mxu0 0.0
      %362 = vmatpush1.msra.mxu0 0.0
      %363 = vmatprep.subr.mxu0 0.0
      %364 = vmatpush1.msra.mxu0 0.0
      %365 = vmatprep.subr.mxu0 0.0
      %366 = vmatpush1.msra.mxu0 0.0
      %367 = vmatprep.subr.mxu0 0.0
      %368 = vmatpush1.msra.mxu0 0.0
      %369 = vmatprep.subr.mxu0 0.0
      %370 = vmatpush1.msra.mxu0 0.0
      %371 = vmatprep.subr.mxu0 0.0
      %372 = vmatpush1.msra.mxu0 0.0
      %373 = vmatprep.subr.mxu0 0.0
      %374 = vmatpush1.msra.mxu0 0.0
      %375 = vmatprep.subr.mxu0 0.0
      %376 = vmatpush1.msra.mxu0 0.0
      %377 = vmatprep.subr.mxu0 0.0
      %378 = vmatpush1.msra.mxu0 0.0
      %379 = vmatprep.subr.mxu0 0.0
      %380 = vmatpush1.msra.mxu0 0.0
      %381 = vmatprep.subr.mxu0 0.0
      %382 = vmatpush1.msra.mxu0 0.0
      %383 = vmatprep.mubr.f32.mxu0 0.0
      %384 = vmatmul.mubr.f32.gmra.mrb[0].mxu0 %v293
      %v385 = vpop.f32.mrb[0].mxu0
      %v386 = vadd.f32 %v317, %v385
      %v387 = vpop.f32.mrb[0].mxu0
      %388 = vmatprep.mubr.f32.mxu0 0.0
      %389 = vmatmul.mubr.f32.gmra.mrb[0].mxu0 %v294
      %v390 = vpop.f32.mrb[0].mxu0
      %v391 = vadd.f32 %v317, %v390
      %v392 = vpop.f32.mrb[0].mxu0
      %393 = vmatprep.mubr.f32.mxu0 0.0
      %394 = vmatmul.mubr.f32.gmra.mrb[0].mxu0 %v295
      %v395 = vpop.f32.mrb[0].mxu0
      %v396 = vadd.f32 %v317, %v395
      %v397 = vpop.f32.mrb[0].mxu0
      %398 = vdwg.mxu0
      %399 = vst [vmem:[#allocation4] sm:$0xff] %v386
      %400 = vst [vmem:[#allocation4 + $0x8] sm:$0xff] %v391
      %401 = vst [vmem:[#allocation4 + $0x10] sm:$0xff] %v396
      %v402 = vld [vmem:[%s2] sm:$0xff]
      %v403 = vld [vmem:[%s2 + $0x8] sm:$0xff]
      %v404 = vld [vmem:[%s2 + $0x10] sm:$0xff]
      %v405 = vld [vmem:[%s2 + $0x18] sm:$0xff]
      %v406 = vld [vmem:[#allocation2] sm:$0xff]
      %v407 = vld [vmem:[#allocation3] sm:$0xff]
      %v408 = vld [vmem:[#allocation4] sm:$0xff]
      %vm409 = vcmask 261120
      %v411 = vsel %vm409, %v406, 0
      %413 = vmatprep.subr.mxu0 0.0
      %414 = vmatpush1.msra.mxu0 %v402
      %415 = vmatprep.subr.mxu0 0.0
      %416 = vmatpush1.msra.mxu0 %v403
      %417 = vmatprep.subr.mxu0 0.0
      %418 = vmatpush1.msra.mxu0 %v404
      %419 = vmatprep.subr.mxu0 0.0
      %420 = vmatpush1.msra.mxu0 %v405
      %421 = vmatprep.subr.mxu0 0.0
      %422 = vmatpush1.msra.mxu0 0.0
      %423 = vmatprep.subr.mxu0 0.0
      %424 = vmatpush1.msra.mxu0 0.0
      %425 = vmatprep.subr.mxu0 0.0
      %426 = vmatpush1.msra.mxu0 0.0
      %427 = vmatprep.subr.mxu0 0.0
      %428 = vmatpush1.msra.mxu0 0.0
      %429 = vmatprep.subr.mxu0 0.0
      %430 = vmatpush1.msra.mxu0 0.0
      %431 = vmatprep.subr.mxu0 0.0
      %432 = vmatpush1.msra.mxu0 0.0
      %433 = vmatprep.subr.mxu0 0.0
      %434 = vmatpush1.msra.mxu0 0.0
      %435 = vmatprep.subr.mxu0 0.0
      %436 = vmatpush1.msra.mxu0 0.0
      %437 = vmatprep.subr.mxu0 0.0
      %438 = vmatpush1.msra.mxu0 0.0
      %439 = vmatprep.subr.mxu0 0.0
      %440 = vmatpush1.msra.mxu0 0.0
      %441 = vmatprep.subr.mxu0 0.0
      %442 = vmatpush1.msra.mxu0 0.0
      %443 = vmatprep.subr.mxu0 0.0
      %444 = vmatpush1.msra.mxu0 0.0
      %445 = vmatprep.subr.mxu0 0.0
      %446 = vmatpush1.msra.mxu0 0.0
      %447 = vmatprep.subr.mxu0 0.0
      %448 = vmatpush1.msra.mxu0 0.0
      %449 = vmatprep.subr.mxu0 0.0
      %450 = vmatpush1.msra.mxu0 0.0
      %451 = vmatprep.subr.mxu0 0.0
      %452 = vmatpush1.msra.mxu0 0.0
      %453 = vmatprep.subr.mxu0 0.0
      %454 = vmatpush1.msra.mxu0 0.0
      %455 = vmatprep.subr.mxu0 0.0
      %456 = vmatpush1.msra.mxu0 0.0
      %457 = vmatprep.subr.mxu0 0.0
      %458 = vmatpush1.msra.mxu0 0.0
      %459 = vmatprep.subr.mxu0 0.0
      %460 = vmatpush1.msra.mxu0 0.0
      %461 = vmatprep.subr.mxu0 0.0
      %462 = vmatpush1.msra.mxu0 0.0
      %463 = vmatprep.subr.mxu0 0.0
      %464 = vmatpush1.msra.mxu0 0.0
      %465 = vmatprep.subr.mxu0 0.0
      %466 = vmatpush1.msra.mxu0 0.0
      %467 = vmatprep.subr.mxu0 0.0
      %468 = vmatpush1.msra.mxu0 0.0
      %469 = vmatprep.subr.mxu0 0.0
      %470 = vmatpush1.msra.mxu0 0.0
      %471 = vmatprep.subr.mxu0 0.0
      %472 = vmatpush1.msra.mxu0 0.0
      %473 = vmatprep.subr.mxu0 0.0
      %474 = vmatpush1.msra.mxu0 0.0
      %475 = vmatprep.subr.mxu0 0.0
      %476 = vmatpush1.msra.mxu0 0.0
      %477 = vmatprep.mubr.f32.mxu0 0.0
      %478 = vmatmul.mubr.f32.gmra.mrb[0].mxu0 %v411
      %v479 = vpop.f32.mrb[0].mxu0
      %v480 = vadd.f32 0.0, %v479
      %v481 = vpop.f32.mrb[0].mxu0
      %482 = vdwg.mxu0
      %v483 = vadd.f32 %v408, %v480
      %v484 = vxor.u32 %v483, 2147483648
      %v485 = vmul.f32 %v484, 1.442695
      %v486 = vpow.pop %v485
      %v487 = vadd.f32 %v486, 1.0
      %v488 = vrcp.pop %v487
      %v489 = vmul.f32 1.0, %v488
      %v490 = vtanh.pop %v483
      %492 = vrot.lane.b32.xlu0 %v407, 32
      %v493 = vpop.permute.xlu0 %492
      %v495 = vmul.f32 %v489, %v493
      %497 = vrot.lane.b32.xlu0 %v490, 32
      %v498 = vpop.permute.xlu0 %497
      %v500 = vmul.f32 %v489, %v498
      %502 = vrot.lane.b32.xlu0 %v500, 32
      %v503 = vpop.permute.xlu0 %502
      %v505 = vadd.f32 %v495, %v503
      %v506 = vtanh.pop %v505
      %508 = vrot.lane.b32.xlu0 %v506, 32
      %v509 = vpop.permute.xlu0 %508
      %v511 = vmul.f32 %v489, %v509
      %513 = vrot.lane.b32.xlu0 %v511, 64
      %v514 = vpop.permute.xlu0 %513
      %516 = vst.msk [vmem:[#allocation5] sm:$0xff] %vm409, %v514
      %s517 = scalar_lea.vmem [#allocation4], 8
      %v518 = vld [vmem:[%s517] sm:$0xff]
      %v519 = vsel %vm409, %v514, 0
      %521 = vmatprep.subr.mxu0 0.0
      %522 = vmatpush1.msra.mxu0 %v402
      %523 = vmatprep.subr.mxu0 0.0
      %524 = vmatpush1.msra.mxu0 %v403
      %525 = vmatprep.subr.mxu0 0.0
      %526 = vmatpush1.msra.mxu0 %v404
      %527 = vmatprep.subr.mxu0 0.0
      %528 = vmatpush1.msra.mxu0 %v405
      %529 = vmatprep.subr.mxu0 0.0
      %530 = vmatpush1.msra.mxu0 0.0
      %531 = vmatprep.subr.mxu0 0.0
      %532 = vmatpush1.msra.mxu0 0.0
      %533 = vmatprep.subr.mxu0 0.0
      %534 = vmatpush1.msra.mxu0 0.0
      %535 = vmatprep.subr.mxu0 0.0
      %536 = vmatpush1.msra.mxu0 0.0
      %537 = vmatprep.subr.mxu0 0.0
      %538 = vmatpush1.msra.mxu0 0.0
      %539 = vmatprep.subr.mxu0 0.0
      %540 = vmatpush1.msra.mxu0 0.0
      %541 = vmatprep.subr.mxu0 0.0
      %542 = vmatpush1.msra.mxu0 0.0
      %543 = vmatprep.subr.mxu0 0.0
      %544 = vmatpush1.msra.mxu0 0.0
      %545 = vmatprep.subr.mxu0 0.0
      %546 = vmatpush1.msra.mxu0 0.0
      %547 = vmatprep.subr.mxu0 0.0
      %548 = vmatpush1.msra.mxu0 0.0
      %549 = vmatprep.subr.mxu0 0.0
      %550 = vmatpush1.msra.mxu0 0.0
      %551 = vmatprep.subr.mxu0 0.0
      %552 = vmatpush1.msra.mxu0 0.0
      %553 = vmatprep.subr.mxu0 0.0
      %554 = vmatpush1.msra.mxu0 0.0
      %555 = vmatprep.subr.mxu0 0.0
      %556 = vmatpush1.msra.mxu0 0.0
      %557 = vmatprep.subr.mxu0 0.0
      %558 = vmatpush1.msra.mxu0 0.0
      %559 = vmatprep.subr.mxu0 0.0
      %560 = vmatpush1.msra.mxu0 0.0
      %561 = vmatprep.subr.mxu0 0.0
      %562 = vmatpush1.msra.mxu0 0.0
      %563 = vmatprep.subr.mxu0 0.0
      %564 = vmatpush1.msra.mxu0 0.0
      %565 = vmatprep.subr.mxu0 0.0
      %566 = vmatpush1.msra.mxu0 0.0
      %567 = vmatprep.subr.mxu0 0.0
      %568 = vmatpush1.msra.mxu0 0.0
      %569 = vmatprep.subr.mxu0 0.0
      %570 = vmatpush1.msra.mxu0 0.0
      %571 = vmatprep.subr.mxu0 0.0
      %572 = vmatpush1.msra.mxu0 0.0
      %573 = vmatprep.subr.mxu0 0.0
      %574 = vmatpush1.msra.mxu0 0.0
      %575 = vmatprep.subr.mxu0 0.0
      %576 = vmatpush1.msra.mxu0 0.0
      %577 = vmatprep.subr.mxu0 0.0
      %578 = vmatpush1.msra.mxu0 0.0
      %579 = vmatprep.subr.mxu0 0.0
      %580 = vmatpush1.msra.mxu0 0.0
      %581 = vmatprep.subr.mxu0 0.0
      %582 = vmatpush1.msra.mxu0 0.0
      %583 = vmatprep.subr.mxu0 0.0
      %584 = vmatpush1.msra.mxu0 0.0
      %585 = vmatprep.mubr.f32.mxu0 0.0
      %586 = vmatmul.mubr.f32.gmra.mrb[0].mxu0 %v519
      %v587 = vpop.f32.mrb[0].mxu0
      %v588 = vadd.f32 0.0, %v587
      %v589 = vpop.f32.mrb[0].mxu0
      %590 = vdwg.mxu0
      %v591 = vadd.f32 %v518, %v588
      %v592 = vxor.u32 %v591, 2147483648
      %v593 = vmul.f32 %v592, 1.442695
      %v594 = vpow.pop %v593
      %v595 = vadd.f32 %v594, 1.0
      %v596 = vrcp.pop %v595
      %v597 = vmul.f32 1.0, %v596
      %v598 = vtanh.pop %v591
      %v599 = vmul.f32 %v597, %v505
      %601 = vrot.lane.b32.xlu0 %v598, 32
      %v602 = vpop.permute.xlu0 %601
      %v604 = vmul.f32 %v597, %v602
      %606 = vrot.lane.b32.xlu0 %v604, 32
      %v607 = vpop.permute.xlu0 %606
      %v609 = vadd.f32 %v599, %v607
      %v610 = vtanh.pop %v609
      %612 = vrot.lane.b32.xlu0 %v610, 32
      %v613 = vpop.permute.xlu0 %612
      %v615 = vmul.f32 %v597, %v613
      %617 = vrot.lane.b32.xlu0 %v615, 64
      %v618 = vpop.permute.xlu0 %617
      %s620 = scalar_lea.vmem [#allocation5], 8
      %621 = vst.msk [vmem:[%s620] sm:$0xff] %vm409, %v618
      %s622 = scalar_lea.vmem [#allocation4], 16
      %v623 = vld [vmem:[%s622] sm:$0xff]
      %v624 = vsel %vm409, %v618, 0
      %626 = vmatprep.subr.mxu0 0.0
      %627 = vmatpush1.msra.mxu0 %v402
      %628 = vmatprep.subr.mxu0 0.0
      %629 = vmatpush1.msra.mxu0 %v403
      %630 = vmatprep.subr.mxu0 0.0
      %631 = vmatpush1.msra.mxu0 %v404
      %632 = vmatprep.subr.mxu0 0.0
      %633 = vmatpush1.msra.mxu0 %v405
      %634 = vmatprep.subr.mxu0 0.0
      %635 = vmatpush1.msra.mxu0 0.0
      %636 = vmatprep.subr.mxu0 0.0
      %637 = vmatpush1.msra.mxu0 0.0
      %638 = vmatprep.subr.mxu0 0.0
      %639 = vmatpush1.msra.mxu0 0.0
      %640 = vmatprep.subr.mxu0 0.0
      %641 = vmatpush1.msra.mxu0 0.0
      %642 = vmatprep.subr.mxu0 0.0
      %643 = vmatpush1.msra.mxu0 0.0
      %644 = vmatprep.subr.mxu0 0.0
      %645 = vmatpush1.msra.mxu0 0.0
      %646 = vmatprep.subr.mxu0 0.0
      %647 = vmatpush1.msra.mxu0 0.0
      %648 = vmatprep.subr.mxu0 0.0
      %649 = vmatpush1.msra.mxu0 0.0
      %650 = vmatprep.subr.mxu0 0.0
      %651 = vmatpush1.msra.mxu0 0.0
      %652 = vmatprep.subr.mxu0 0.0
      %653 = vmatpush1.msra.mxu0 0.0
      %654 = vmatprep.subr.mxu0 0.0
      %655 = vmatpush1.msra.mxu0 0.0
      %656 = vmatprep.subr.mxu0 0.0
      %657 = vmatpush1.msra.mxu0 0.0
      %658 = vmatprep.subr.mxu0 0.0
      %659 = vmatpush1.msra.mxu0 0.0
      %660 = vmatprep.subr.mxu0 0.0
      %661 = vmatpush1.msra.mxu0 0.0
      %662 = vmatprep.subr.mxu0 0.0
      %663 = vmatpush1.msra.mxu0 0.0
      %664 = vmatprep.subr.mxu0 0.0
      %665 = vmatpush1.msra.mxu0 0.0
      %666 = vmatprep.subr.mxu0 0.0
      %667 = vmatpush1.msra.mxu0 0.0
      %668 = vmatprep.subr.mxu0 0.0
      %669 = vmatpush1.msra.mxu0 0.0
      %670 = vmatprep.subr.mxu0 0.0
      %671 = vmatpush1.msra.mxu0 0.0
      %672 = vmatprep.subr.mxu0 0.0
      %673 = vmatpush1.msra.mxu0 0.0
      %674 = vmatprep.subr.mxu0 0.0
      %675 = vmatpush1.msra.mxu0 0.0
      %676 = vmatprep.subr.mxu0 0.0
      %677 = vmatpush1.msra.mxu0 0.0
      %678 = vmatprep.subr.mxu0 0.0
      %679 = vmatpush1.msra.mxu0 0.0
      %680 = vmatprep.subr.mxu0 0.0
      %681 = vmatpush1.msra.mxu0 0.0
      %682 = vmatprep.subr.mxu0 0.0
      %683 = vmatpush1.msra.mxu0 0.0
      %684 = vmatprep.subr.mxu0 0.0
      %685 = vmatpush1.msra.mxu0 0.0
      %686 = vmatprep.subr.mxu0 0.0
      %687 = vmatpush1.msra.mxu0 0.0
      %688 = vmatprep.subr.mxu0 0.0
      %689 = vmatpush1.msra.mxu0 0.0
      %690 = vmatprep.mubr.f32.mxu0 0.0
      %691 = vmatmul.mubr.f32.gmra.mrb[0].mxu0 %v624
      %v692 = vpop.f32.mrb[0].mxu0
      %v693 = vadd.f32 0.0, %v692
      %v694 = vpop.f32.mrb[0].mxu0
      %695 = vdwg.mxu0
      %v696 = vadd.f32 %v623, %v693
      %v697 = vxor.u32 %v696, 2147483648
      %v698 = vmul.f32 %v697, 1.442695
      %v699 = vpow.pop %v698
      %v700 = vadd.f32 %v699, 1.0
      %v701 = vrcp.pop %v700
      %v702 = vmul.f32 1.0, %v701
      %v703 = vtanh.pop %v696
      %v704 = vmul.f32 %v702, %v609
      %706 = vrot.lane.b32.xlu0 %v703, 32
      %v707 = vpop.permute.xlu0 %706
      %v709 = vmul.f32 %v702, %v707
      %711 = vrot.lane.b32.xlu0 %v709, 32
      %v712 = vpop.permute.xlu0 %711
      %v714 = vadd.f32 %v704, %v712
      %v715 = vtanh.pop %v714
      %717 = vrot.lane.b32.xlu0 %v715, 32
      %v718 = vpop.permute.xlu0 %717
      %v720 = vmul.f32 %v702, %v718
      %722 = vrot.lane.b32.xlu0 %v720, 64
      %v723 = vpop.permute.xlu0 %722
      %s725 = scalar_lea.vmem [#allocation5], 16
      %726 = vst.msk [vmem:[%s725] sm:$0xff] %vm409, %v723
      %727 = vst.msk [vmem:[#allocation2] sm:$0xff] %vm409, %v723
      %729 = vrot.lane.b32.xlu0 %v714, 96
      %v730 = vpop.permute.xlu0 %729
      %732 = vst.msk [vmem:[#allocation3] sm:$0xff] %vm409, %v730
      %v733 = vld [vmem:[#allocation5] sm:$0xff]
      %v734 = vld [vmem:[#allocation5 + $0x8] sm:$0xff]
      %v735 = vld [vmem:[#allocation5 + $0x10] sm:$0xff]
      %v736 = vld [vmem:[%s4] sm:$0xff]
      %v737 = vld [vmem:[%s4 + $0x8] sm:$0xff]
      %v738 = vld [vmem:[%s4 + $0x10] sm:$0xff]
      %v739 = vld [vmem:[%s4 + $0x18] sm:$0xff]
      %v740 = vld [vmem:[%s5] sm:$0x1]
      %v742 = vlaneseq
      %v743 = vshrl.u32 %v742, 7
      %v744 = vsub.s32 0, %v743
      %v745 = vrot.slane %v740, %v744
      %v748 = vsel %vm409, %v733, 0
      %v751 = vsel %vm409, %v734, 0
      %v754 = vsel %vm409, %v735, 0
      %756 = vmatprep.subr.mxu0 0.0
      %757 = vmatpush1.msra.mxu0 %v736
      %758 = vmatprep.subr.mxu0 0.0
      %759 = vmatpush1.msra.mxu0 %v737
      %760 = vmatprep.subr.mxu0 0.0
      %761 = vmatpush1.msra.mxu0 %v738
      %762 = vmatprep.subr.mxu0 0.0
      %763 = vmatpush1.msra.mxu0 %v739
      %764 = vmatprep.subr.mxu0 0.0
      %765 = vmatpush1.msra.mxu0 0.0
      %766 = vmatprep.subr.mxu0 0.0
      %767 = vmatpush1.msra.mxu0 0.0
      %768 = vmatprep.subr.mxu0 0.0
      %769 = vmatpush1.msra.mxu0 0.0
      %770 = vmatprep.subr.mxu0 0.0
      %771 = vmatpush1.msra.mxu0 0.0
      %772 = vmatprep.subr.mxu0 0.0
      %773 = vmatpush1.msra.mxu0 0.0
      %774 = vmatprep.subr.mxu0 0.0
      %775 = vmatpush1.msra.mxu0 0.0
      %776 = vmatprep.subr.mxu0 0.0
      %777 = vmatpush1.msra.mxu0 0.0
      %778 = vmatprep.subr.mxu0 0.0
      %779 = vmatpush1.msra.mxu0 0.0
      %780 = vmatprep.subr.mxu0 0.0
      %781 = vmatpush1.msra.mxu0 0.0
      %782 = vmatprep.subr.mxu0 0.0
      %783 = vmatpush1.msra.mxu0 0.0
      %784 = vmatprep.subr.mxu0 0.0
      %785 = vmatpush1.msra.mxu0 0.0
      %786 = vmatprep.subr.mxu0 0.0
      %787 = vmatpush1.msra.mxu0 0.0
      %788 = vmatprep.subr.mxu0 0.0
      %789 = vmatpush1.msra.mxu0 0.0
      %790 = vmatprep.subr.mxu0 0.0
      %791 = vmatpush1.msra.mxu0 0.0
      %792 = vmatprep.subr.mxu0 0.0
      %793 = vmatpush1.msra.mxu0 0.0
      %794 = vmatprep.subr.mxu0 0.0
      %795 = vmatpush1.msra.mxu0 0.0
      %796 = vmatprep.subr.mxu0 0.0
      %797 = vmatpush1.msra.mxu0 0.0
      %798 = vmatprep.subr.mxu0 0.0
      %799 = vmatpush1.msra.mxu0 0.0
      %800 = vmatprep.subr.mxu0 0.0
      %801 = vmatpush1.msra.mxu0 0.0
      %802 = vmatprep.subr.mxu0 0.0
      %803 = vmatpush1.msra.mxu0 0.0
      %804 = vmatprep.subr.mxu0 0.0
      %805 = vmatpush1.msra.mxu0 0.0
      %806 = vmatprep.subr.mxu0 0.0
      %807 = vmatpush1.msra.mxu0 0.0
      %808 = vmatprep.subr.mxu0 0.0
      %809 = vmatpush1.msra.mxu0 0.0
      %810 = vmatprep.subr.mxu0 0.0
      %811 = vmatpush1.msra.mxu0 0.0
      %812 = vmatprep.subr.mxu0 0.0
      %813 = vmatpush1.msra.mxu0 0.0
      %814 = vmatprep.subr.mxu0 0.0
      %815 = vmatpush1.msra.mxu0 0.0
      %816 = vmatprep.subr.mxu0 0.0
      %817 = vmatpush1.msra.mxu0 0.0
      %818 = vmatprep.subr.mxu0 0.0
      %819 = vmatpush1.msra.mxu0 0.0
      %820 = vmatprep.mubr.f32.mxu0 0.0
      %821 = vmatmul.mubr.f32.gmra.mrb[0].mxu0 %v748
      %v822 = vpop.f32.mrb[0].mxu0
      %v823 = vadd.f32 %v745, %v822
      %v824 = vpop.f32.mrb[0].mxu0
      %825 = vmatprep.mubr.f32.mxu0 0.0
      %826 = vmatmul.mubr.f32.gmra.mrb[0].mxu0 %v751
      %v827 = vpop.f32.mrb[0].mxu0
      %v828 = vadd.f32 %v745, %v827
      %v829 = vpop.f32.mrb[0].mxu0
      %830 = vmatprep.mubr.f32.mxu0 0.0
      %831 = vmatmul.mubr.f32.gmra.mrb[0].mxu0 %v754
      %v832 = vpop.f32.mrb[0].mxu0
      %v833 = vadd.f32 %v745, %v832
      %v834 = vpop.f32.mrb[0].mxu0
      %835 = vdwg.mxu0
      %v836 = vxor.u32 %v823, 2147483648
      %v837 = vxor.u32 %v828, 2147483648
      %v838 = vxor.u32 %v833, 2147483648
      %v839 = vmul.f32 %v836, 1.442695
      %v840 = vpow.pop %v839
      %v841 = vmul.f32 %v837, 1.442695
      %v842 = vpow.pop %v841
      %v843 = vmul.f32 %v838, 1.442695
      %v844 = vpow.pop %v843
      %v845 = vadd.f32 %v840, 1.0
      %v846 = vadd.f32 %v842, 1.0
      %v847 = vadd.f32 %v844, 1.0
      %v848 = vrcp.pop %v845
      %v849 = vmul.f32 1.0, %v848
      %v850 = vrcp.pop %v846
      %v851 = vmul.f32 1.0, %v850
      %v852 = vrcp.pop %v847
      %v853 = vmul.f32 1.0, %v852
      %854 = vst [vmem:[%s284] sm:$0xff] %v849
      %855 = vst [vmem:[%s284 + $0x8] sm:$0xff] %v851
      %856 = vst [vmem:[%s284 + $0x10] sm:$0xff] %v853
      %s857 = smul.u32 3, %s22
      %p858 = scmp.lt.s32.totalorder %s857, 8
      %s859 = scalar_select %p858, %s857, 8
      %p860 = scmp.lt.s32.totalorder %s21, 0
      %s861 = scalar_select %p860, %s21, 0
      %s862 = sadd.s32 %s861, %s859
      %s863 = smul.addr %s862, 8
      %s864 = scalar_lea.vmem %s6, %s863
      // Predicated region
      $region49: #{dkt_forward.1} parent=43 // pred_check
        %p865 = pneg %p182
      $region50: #{dkt_forward.1} parent=43 // pred_check_branch
        %867 = sbr.rel (%p865) target = $region52
      $region51: #{dkt_forward.1} parent=43 // pred_region
        %s868 = smul.u32 3, %s22
      $region52: #{dkt_forward.1} parent=43 // pred_fallthru
        _
    $region44: #{dkt_forward.1} parent=5 // pred_fallthru
      _
    %p869 = scmp.le.s32.totalorder 2, %s12
    // Predicated region
    $region53: #{dkt_forward.1} parent=5 // pred_check
      %p870 = pneg %p869
    $region54: #{dkt_forward.1} parent=5 // pred_check_branch
      %872 = sbr.rel (%p870) target = $region56
    $region55: #{dkt_forward.1} parent=5 // pred_region
      %s873 = ssub.s32 %s12, 2
      // Predicated region
      $region57: #{dkt_forward.1} parent=55 // pred_check
        %p874 = pneg %p188
      $region58: #{dkt_forward.1} parent=55 // pred_check_branch
        %876 = sbr.rel (%p874) target = $region60
      $region59: #{dkt_forward.1} parent=55 // pred_region
        %s877 = smul.u32 3, %s24
        %p878 = scmp.lt.s32.totalorder %s877, 8
        %s879 = scalar_select %p878, %s877, 8
        %p880 = scmp.lt.s32.totalorder %s23, 0
        %s881 = scalar_select %p880, %s23, 0
        %s882 = sadd.s32 %s881, %s879
        %s883 = smul.addr %s882, 8
        %s884 = scalar_lea.vmem %s6, %s883
      $region60: #{dkt_forward.1} parent=55 // pred_fallthru
        _
    $region56: #{dkt_forward.1} parent=5 // pred_fallthru
      _
  $region6: #{dkt_forward.1} parent=0 // loop_footer
    %s16 = sadd.s32 1, %s12
  $region7: #{dkt_forward.1} parent=0 // loop_footer_branch
    %11 = sbr.rel target = $region3
  $region8: #{dkt_forward.1} parent=0 // loop_exit
    _

</llo_original>
